<compile_context>
chip_gen: v7x
topology: tpu7x:2x2x1
jax: 0.10.0
libtpu: 0.0.40
codegen_flags: <defaults>
</compile_context>

<pallas_src>
import jax
import jax.numpy as jnp
from jax.experimental import pallas as pl
from jax.experimental.pallas import tpu as pltpu

# ----------------------------- model sizes ---------------------------------
IMG_H, IMG_W = 14, 14          # Proj1 MNIST pair images are 14x14
D_IN = IMG_H * IMG_W           # 196 flattened pixels per image
D_IN2 = 2 * D_IN               # 392: both images, contiguous per row
H1 = 64                        # digit-model hidden width
H1_2 = 2 * H1                  # 128: block-diagonal hidden (lane-dense)
N_DIGITS = 10                  # digit-model output (one-hot logits)
H2 = 32                        # comparison-model hidden width
N_OUT = 2                      # comparison-model output classes
OUT_PAD = 128                  # lane-dense padded output width

TB_MAX = 2048                  # batch tile: ~3.2 MiB/tile f32, safe on v7x 64 MiB VMEM


# ------------------------------ Pallas kernel -------------------------------
def full_net_hot_kernel(
    x_ref,                       # [TB, 392]  (img1 | img2 per row)
    w1_ref, b1_ref,              # [392, 128], [1, 128]   block-diag layer 1
    w23_ref, b23_ref,            # [128, 32],  [1, 32]    fused digit-head + comparison fc1
    w4_ref, b4_ref,              # [32, 128],  [1, 128]   comparison fc2, zero-padded to 128
    out_ref,                     # [TB, 128]  (first 2 columns valid)
):
    # Layer 1 (both images at once via block-diagonal weights), lane-dense [TB,128].
    h = jnp.dot(x_ref[...], w1_ref[...], preferred_element_type=jnp.float32)
    h = jnp.maximum(h + b1_ref[...], 0.0)

    # Folded digit-head @ comparison-fc1 (exact algebra: no ReLU in between).
    m = jnp.dot(h, w23_ref[...], preferred_element_type=jnp.float32)
    m = jnp.maximum(m + b23_ref[...], 0.0)          # [TB, 32]

    # Comparison fc2, padded to a lane-dense 128-wide store.
    o = jnp.dot(m, w4_ref[...], preferred_element_type=jnp.float32)
    out_ref[...] = o + b4_ref[...]


# ------------------------------ wrapper --------------------------------------
def full_net_hot(x, params):
    """x: [B, 2, H, W] float32 (NCHW).  Returns comparison logits [B, 2]."""
    B = x.shape[0]

    # Contiguous reshape: row = [img1 flattened | img2 flattened]. No strided copies.
    x_flat = x.reshape(B, D_IN2)

    w1, b1, w2, b2, w3, b3, w4, b4 = params

    # ---- trace-time weight packing (tiny GEMMs, negligible cost) ----
    # Block-diagonal layer 1 applying the shared digit fc1 to both images.
    w1_blk = jnp.zeros((D_IN2, H1_2), jnp.float32)
    w1_blk = w1_blk.at[:D_IN, :H1].set(w1).at[D_IN:, H1:].set(w1)
    b1_dup = jnp.concatenate([b1, b1]).reshape(1, H1_2)

    # Fold digit fc2 into comparison fc1 (no nonlinearity between them):
    #   cat(h1@w2+b2, h2@w2+b2) @ w3 + b3
    # = h1 @ (w2@w3[:10]) + h2 @ (w2@w3[10:]) + (b2@w3[:10] + b2@w3[10:] + b3)
    w3a, w3b = w3[:N_DIGITS, :], w3[N_DIGITS:, :]
    w23 = jnp.concatenate([w2 @ w3a, w2 @ w3b], axis=0)          # [128, 32]
    b23 = (b2 @ w3a + b2 @ w3b + b3).reshape(1, H2)              # [1, 32]

    # Pad final layer to a lane-dense 128-wide output (first 2 cols valid).
    w4_pad = jnp.zeros((H2, OUT_PAD), jnp.float32).at[:, :N_OUT].set(w4)
    b4_pad = jnp.zeros((1, OUT_PAD), jnp.float32).at[0, :N_OUT].set(b4)

    # ---- batch tiling ----
    pad_b = -(-B // 8) * 8                     # sublane-aligned
    tb = min(TB_MAX, pad_b)
    pad_b = -(-pad_b // tb) * tb               # multiple of tile
    if pad_b != B:
        x_flat = jnp.pad(x_flat, ((0, pad_b - B), (0, 0)))

    grid = (pad_b // tb,)

    def const_spec(shape):
        return pl.BlockSpec(shape, lambda i: (0, 0))

    out = pl.pallas_call(
        full_net_hot_kernel,
        out_shape=jax.ShapeDtypeStruct((pad_b, OUT_PAD), jnp.float32),
        grid=grid,
        in_specs=[
            pl.BlockSpec((tb, D_IN2), lambda i: (i, 0)),     # activations: tiled
            const_spec((D_IN2, H1_2)), const_spec((1, H1_2)),  # weights: resident
            const_spec((H1_2, H2)), const_spec((1, H2)),
            const_spec((H2, OUT_PAD)), const_spec((1, OUT_PAD)),
        ],
        out_specs=pl.BlockSpec((tb, OUT_PAD), lambda i: (i, 0)),
        compiler_params=pltpu.CompilerParams(
            dimension_semantics=("parallel",),
            vmem_limit_bytes=32 * 1024 * 1024,
        ),
    )(x_flat, w1_blk, b1_dup, w23, b23, w4_pad, b4_pad)

    return out[:B, :N_OUT]


# ------------------------------ parameter init --------------------------------
def init_params(key):
    """PyTorch-style Linear init: U(-1/sqrt(fan_in), 1/sqrt(fan_in))."""
    def linear(key, fan_in, fan_out):
        kw, kb = jax.random.split(key)
        bound = 1.0 / jnp.sqrt(fan_in)
        w = jax.random.uniform(kw, (fan_in, fan_out), jnp.float32, -bound, bound)
        b = jax.random.uniform(kb, (fan_out,), jnp.float32, -bound, bound)
        return w, b

    k1, k2, k3, k4 = jax.random.split(key, 4)
    w1, b1 = linear(k1, D_IN, H1)              # digit model fc1
    w2, b2 = linear(k2, H1, N_DIGITS)          # digit model fc2
    w3, b3 = linear(k3, 2 * N_DIGITS, H2)      # comparison fc1 (20 -> 32)
    w4, b4 = linear(k4, H2, N_OUT)             # comparison fc2 (32 -> 2)
    return (w1, b1, w2, b2, w3, b3, w4, b4)


# ------------------------------ reference (plain JAX) -------------------------
def full_net_hot_ref(x, params):
    B = x.shape[0]
    w1, b1, w2, b2, w3, b3, w4, b4 = params
    img1 = x[:, 0, :, :].reshape(B, D_IN)
    img2 = x[:, 1, :, :].reshape(B, D_IN)

    def digit(img):
        h = jnp.maximum(img @ w1 + b1, 0.0)
        return h @ w2 + b2

    xc = jnp.concatenate([digit(img1), digit(img2)], axis=1)
    h = jnp.maximum(xc @ w3 + b3, 0.0)
    return h @ w4 + b4


if __name__ == "__main__":
    key = jax.random.PRNGKey(0)
    k_x, k_p = jax.random.split(key)

    B = 2
    x = jax.random.normal(k_x, (B, 2, IMG_H, IMG_W), jnp.float32)
    params = init_params(k_p)

    out = full_net_hot(x, params)
    out = jax.block_until_ready(out)

    ref = full_net_hot_ref(x, params)
    assert out.shape == (B, N_OUT)
    assert jnp.allclose(out, ref, atol=1e-4, rtol=1e-4), (out, ref)

    print("KERNEL_OK")
</pallas_src>

<mosaic_0001>
module attributes {stable_mosaic.version = 11 : i64} {
  func.func @full_net_hot_kernel(%arg0: i32, %arg1: memref<8x392xf32, #tpu.memory_space<vmem>>, %arg2: memref<392x128xf32, #tpu.memory_space<vmem>>, %arg3: memref<1x128xf32, #tpu.memory_space<vmem>>, %arg4: memref<128x32xf32, #tpu.memory_space<vmem>>, %arg5: memref<1x32xf32, #tpu.memory_space<vmem>>, %arg6: memref<32x128xf32, #tpu.memory_space<vmem>>, %arg7: memref<1x128xf32, #tpu.memory_space<vmem>>, %arg8: memref<8x128xf32, #tpu.memory_space<vmem>>) attributes {dimension_semantics = [#tpu.dimension_semantics<parallel>], iteration_bounds = array<i64: 1>, scalar_prefetch = 0 : i64, scratch_operands = 0 : i64, tpu.core_type = #tpu.core_type<tc>, window_params = [{transform_indices = @transform_0, window_bounds = array<i64: 8, 392>}, {pipeline_mode = #tpu.pipeline_mode<synchronous>, transform_indices = @transform_1, window_bounds = array<i64: 392, 128>}, {pipeline_mode = #tpu.pipeline_mode<synchronous>, transform_indices = @transform_2, window_bounds = array<i64: 1, 128>}, {pipeline_mode = #tpu.pipeline_mode<synchronous>, transform_indices = @transform_3, window_bounds = array<i64: 128, 32>}, {pipeline_mode = #tpu.pipeline_mode<synchronous>, transform_indices = @transform_4, window_bounds = array<i64: 1, 32>}, {pipeline_mode = #tpu.pipeline_mode<synchronous>, transform_indices = @transform_5, window_bounds = array<i64: 32, 128>}, {pipeline_mode = #tpu.pipeline_mode<synchronous>, transform_indices = @transform_6, window_bounds = array<i64: 1, 128>}, {transform_indices = @transform_7, window_bounds = array<i64: 8, 128>}]} {
    %c0 = arith.constant 0 : index
    %c0_0 = arith.constant 0 : index
    %0 = vector.load %arg1[%c0, %c0_0] : memref<8x392xf32, #tpu.memory_space<vmem>>, vector<8x392xf32>
    %c0_1 = arith.constant 0 : index
    %c0_2 = arith.constant 0 : index
    %1 = vector.load %arg2[%c0_1, %c0_2] : memref<392x128xf32, #tpu.memory_space<vmem>>, vector<392x128xf32>
    %cst = arith.constant dense<0.000000e+00> : vector<8x128xf32>
    %2 = tpu.matmul %0, %1, %cst {dimension_numbers = #tpu.dot_dimension_numbers<[1], [0], [0], [1], [0, 0, 1, 1], [], []>} : vector<8x392xf32>, vector<392x128xf32>, vector<8x128xf32> -> vector<8x128xf32>
    %c0_3 = arith.constant 0 : index
    %c0_4 = arith.constant 0 : index
    %3 = vector.load %arg3[%c0_3, %c0_4] : memref<1x128xf32, #tpu.memory_space<vmem>>, vector<1x128xf32>
    %4 = vector.broadcast %3 : vector<1x128xf32> to vector<8x128xf32>
    %5 = arith.addf %2, %4 : vector<8x128xf32>
    %cst_5 = arith.constant 0.000000e+00 : f32
    %6 = vector.broadcast %cst_5 : f32 to vector<8x128xf32>
    %7 = arith.maximumf %5, %6 : vector<8x128xf32>
    %c0_6 = arith.constant 0 : index
    %c0_7 = arith.constant 0 : index
    %8 = vector.load %arg4[%c0_6, %c0_7] : memref<128x32xf32, #tpu.memory_space<vmem>>, vector<128x32xf32>
    %cst_8 = arith.constant dense<0.000000e+00> : vector<8x32xf32>
    %9 = tpu.matmul %7, %8, %cst_8 {dimension_numbers = #tpu.dot_dimension_numbers<[1], [0], [0], [1], [0, 0, 1, 1], [], []>} : vector<8x128xf32>, vector<128x32xf32>, vector<8x32xf32> -> vector<8x32xf32>
    %c0_9 = arith.constant 0 : index
    %c0_10 = arith.constant 0 : index
    %10 = vector.load %arg5[%c0_9, %c0_10] : memref<1x32xf32, #tpu.memory_space<vmem>>, vector<1x32xf32>
    %11 = vector.broadcast %10 : vector<1x32xf32> to vector<8x32xf32>
    %12 = arith.addf %9, %11 : vector<8x32xf32>
    %cst_11 = arith.constant 0.000000e+00 : f32
    %13 = vector.broadcast %cst_11 : f32 to vector<8x32xf32>
    %14 = arith.maximumf %12, %13 : vector<8x32xf32>
    %c0_12 = arith.constant 0 : index
    %c0_13 = arith.constant 0 : index
    %15 = vector.load %arg6[%c0_12, %c0_13] : memref<32x128xf32, #tpu.memory_space<vmem>>, vector<32x128xf32>
    %cst_14 = arith.constant dense<0.000000e+00> : vector<8x128xf32>
    %16 = tpu.matmul %14, %15, %cst_14 {dimension_numbers = #tpu.dot_dimension_numbers<[1], [0], [0], [1], [0, 0, 1, 1], [], []>} : vector<8x32xf32>, vector<32x128xf32>, vector<8x128xf32> -> vector<8x128xf32>
    %c0_15 = arith.constant 0 : index
    %c0_16 = arith.constant 0 : index
    %17 = vector.load %arg7[%c0_15, %c0_16] : memref<1x128xf32, #tpu.memory_space<vmem>>, vector<1x128xf32>
    %18 = vector.broadcast %17 : vector<1x128xf32> to vector<8x128xf32>
    %19 = arith.addf %16, %18 : vector<8x128xf32>
    %c0_17 = arith.constant 0 : index
    %c0_18 = arith.constant 0 : index
    %20 = vector.load %arg8[%c0_17, %c0_18] : memref<8x128xf32, #tpu.memory_space<vmem>>, vector<8x128xf32>
    tpu.vector_store %arg8[%c0_17, %c0_18], %19 {strides = array<i32>} : memref<8x128xf32, #tpu.memory_space<vmem>>, vector<8x128xf32>,
    return
  }
  func.func @transform_0(%arg0: i32) -> (i32, i32) {
    %c0_i32 = arith.constant 0 : i32
    %c0_i32_0 = arith.constant 0 : i32
    return %arg0, %c0_i32 : i32, i32
  }
  func.func @transform_1(%arg0: i32) -> (i32, i32) {
    %c0_i32 = arith.constant 0 : i32
    %c0_i32_0 = arith.constant 0 : i32
    %c0_i32_1 = arith.constant 0 : i32
    return %c0_i32, %c0_i32_0 : i32, i32
  }
  func.func @transform_2(%arg0: i32) -> (i32, i32) {
    %c0_i32 = arith.constant 0 : i32
    %c0_i32_0 = arith.constant 0 : i32
    %c0_i32_1 = arith.constant 0 : i32
    return %c0_i32, %c0_i32_0 : i32, i32
  }
  func.func @transform_3(%arg0: i32) -> (i32, i32) {
    %c0_i32 = arith.constant 0 : i32
    %c0_i32_0 = arith.constant 0 : i32
    %c0_i32_1 = arith.constant 0 : i32
    return %c0_i32, %c0_i32_0 : i32, i32
  }
  func.func @transform_4(%arg0: i32) -> (i32, i32) {
    %c0_i32 = arith.constant 0 : i32
    %c0_i32_0 = arith.constant 0 : i32
    %c0_i32_1 = arith.constant 0 : i32
    return %c0_i32, %c0_i32_0 : i32, i32
  }
  func.func @transform_5(%arg0: i32) -> (i32, i32) {
    %c0_i32 = arith.constant 0 : i32
    %c0_i32_0 = arith.constant 0 : i32
    %c0_i32_1 = arith.constant 0 : i32
    return %c0_i32, %c0_i32_0 : i32, i32
  }
  func.func @transform_6(%arg0: i32) -> (i32, i32) {
    %c0_i32 = arith.constant 0 : i32
    %c0_i32_0 = arith.constant 0 : i32
    %c0_i32_1 = arith.constant 0 : i32
    return %c0_i32, %c0_i32_0 : i32, i32
  }
  func.func @transform_7(%arg0: i32) -> (i32, i32) {
    %c0_i32 = arith.constant 0 : i32
    %c0_i32_0 = arith.constant 0 : i32
    return %arg0, %c0_i32 : i32, i32
  }
}

</mosaic_0001>

<llo_original>
// kernel: tpu_custom_call.1
$region0: #{tpu_custom_call.1}
  #allocation0 [shape = 'u32[]', space=smem, size = 0x4, offset = 0x4, fixed_abs, tag = 'smem constant byte address 0x4 - core index']
  #allocation1 [shape = 'u32[144,128]{1,0:T(1,128)}', space=vmem, size = 0x12000, scoped, tag = 'internal scratch']
  %s0 = inlined_call_operand.vmem [shape: f32[8,392], index: 0, kind: input, shape index: {}]
  %s1 = inlined_call_operand.hbm [shape: f32[392,128], index: 1, kind: input, shape index: {}]
  %s2 = inlined_call_operand.vmem [shape: f32[1,128], index: 2, kind: input, shape index: {}]
  %s3 = inlined_call_operand.vmem [shape: f32[128,32], index: 3, kind: input, shape index: {}]
  %s4 = inlined_call_operand.vmem [shape: f32[1,32], index: 4, kind: input, shape index: {}]
  %s5 = inlined_call_operand.vmem [shape: f32[32,128], index: 5, kind: input, shape index: {}]
  %s6 = inlined_call_operand.vmem [shape: f32[1,128], index: 6, kind: input, shape index: {}]
  %s7 = inlined_call_operand.hbm [shape: f32[8,128], index: 7, kind: output, shape index: {}]
  %s8 = sld [smem:[#allocation0]]
  $region42: #{tpu_custom_call.1} parent=0
    _
  %s10 = ssub.s32 1, %s8
  %s11 = scalar_select 0, %s10, %s8
  $region1: #{tpu_custom_call.1} parent=0
    #allocation2 [shape = 'u8[200704]{0}', space=vmem, size = 0x31000, scoped, tag = 'input window, operand 1, single buffered']
    #allocation3 [shape = 's32[1]{0}', space=sflag, size = 0x4, scoped, tag = 'scoped memory for tpu_custom_call.1']
    #allocation4 [shape = 's32[1]{0}', space=sflag, size = 0x4, scoped, tag = 'scoped memory for tpu_custom_call.1']
    #allocation5 [shape = 'u8[4096]{0}', space=vmem, size = 0x1000, scoped, tag = 'output window, operand 0, single buffered']
    %12 = vsyncpa [#allocation3], 0
    %13 = vsyncpa [#allocation4], 0
    // Predicated region
    $region2: #{tpu_custom_call.1} parent=1 // pred_check
      _
    $region3: #{tpu_custom_call.1} parent=1 // pred_check_branch
      %15 = sbr.rel (0) target = $region5
    $region4: #{tpu_custom_call.1} parent=1 // pred_region
      _
    $region5: #{tpu_custom_call.1} parent=1 // pred_fallthru
      _
    // Predicated region
    $region6: #{tpu_custom_call.1} parent=1 // pred_check
      _
    $region7: #{tpu_custom_call.1} parent=1 // pred_check_branch
      %17 = sbr.rel (0) target = $region9
    $region8: #{tpu_custom_call.1} parent=1 // pred_region
      %s19 = ssub.s32 6272, 6272
      %20 = vsyncadd [#allocation3], %s19
      %s21 = sshll.u32 [#allocation2], 4
      %s22 = int_to_ptr.vmem [resolvable:$true] %s21
      %27 = dma.hbm_to_vmem [thread:$0]  %s1, 6272, %s22, [#allocation3], 128, 128, 8
    $region9: #{tpu_custom_call.1} parent=1 // pred_fallthru
      _
    // Predicated region
    $region10: #{tpu_custom_call.1} parent=1 // pred_check
      _
    $region11: #{tpu_custom_call.1} parent=1 // pred_check_branch
      %29 = sbr.rel (0) target = $region13
    $region12: #{tpu_custom_call.1} parent=1 // pred_region
      _
    $region13: #{tpu_custom_call.1} parent=1 // pred_fallthru
      _
    // Predicated region
    $region14: #{tpu_custom_call.1} parent=1 // pred_check
      _
    $region15: #{tpu_custom_call.1} parent=1 // pred_check_branch
      %31 = sbr.rel (0) target = $region17
    $region16: #{tpu_custom_call.1} parent=1 // pred_region
      _
    $region17: #{tpu_custom_call.1} parent=1 // pred_fallthru
      _
    // Predicated region
    $region18: #{tpu_custom_call.1} parent=1 // pred_check
      _
    $region19: #{tpu_custom_call.1} parent=1 // pred_check_branch
      %33 = sbr.rel (0) target = $region21
    $region20: #{tpu_custom_call.1} parent=1 // pred_region
      _
    $region21: #{tpu_custom_call.1} parent=1 // pred_fallthru
      _
    // Predicated region
    $region22: #{tpu_custom_call.1} parent=1 // pred_check
      _
    $region23: #{tpu_custom_call.1} parent=1 // pred_check_branch
      %35 = sbr.rel (0) target = $region25
    $region24: #{tpu_custom_call.1} parent=1 // pred_region
      _
    $region25: #{tpu_custom_call.1} parent=1 // pred_fallthru
      _
    // Predicated region
    $region26: #{tpu_custom_call.1} parent=1 // pred_check
      _
    $region27: #{tpu_custom_call.1} parent=1 // pred_check_branch
      %37 = sbr.rel (0) target = $region29
    $region28: #{tpu_custom_call.1} parent=1 // pred_region
      _
    $region29: #{tpu_custom_call.1} parent=1 // pred_fallthru
      _
    // Predicated region
    $region30: #{tpu_custom_call.1} parent=1 // pred_check
      _
    $region31: #{tpu_custom_call.1} parent=1 // pred_check_branch
      %39 = sbr.rel (0) target = $region33
    $region32: #{tpu_custom_call.1} parent=1 // pred_region
      %40 = dma.done [#allocation3], 6272
    $region33: #{tpu_custom_call.1} parent=1 // pred_fallthru
      _
    %v41 = vld [vmem:[%s0] sm:$0xff]
    %v42 = vld [vmem:[%s0 + $0x8] sm:$0xff]
    %v43 = vld [vmem:[%s0 + $0x10] sm:$0xff]
    %v44 = vld [vmem:[%s0 + $0x18] sm:$0xff]
    %v45 = vld [vmem:[#allocation2] sm:$0xff]
    %v46 = vld [vmem:[#allocation2 + $0x8] sm:$0xff]
    %v47 = vld [vmem:[#allocation2 + $0x10] sm:$0xff]
    %v48 = vld [vmem:[#allocation2 + $0x18] sm:$0xff]
    %v49 = vld [vmem:[#allocation2 + $0x20] sm:$0xff]
    %v50 = vld [vmem:[#allocation2 + $0x28] sm:$0xff]
    %v51 = vld [vmem:[#allocation2 + $0x30] sm:$0xff]
    %v52 = vld [vmem:[#allocation2 + $0x38] sm:$0xff]
    %v53 = vld [vmem:[#allocation2 + $0x40] sm:$0xff]
    %v54 = vld [vmem:[#allocation2 + $0x48] sm:$0xff]
    %v55 = vld [vmem:[#allocation2 + $0x50] sm:$0xff]
    %v56 = vld [vmem:[#allocation2 + $0x58] sm:$0xff]
    %v57 = vld [vmem:[#allocation2 + $0x60] sm:$0xff]
    %v58 = vld [vmem:[#allocation2 + $0x68] sm:$0xff]
    %v59 = vld [vmem:[#allocation2 + $0x70] sm:$0xff]
    %v60 = vld [vmem:[#allocation2 + $0x78] sm:$0xff]
    %v61 = vld [vmem:[#allocation2 + $0x80] sm:$0xff]
    %v62 = vld [vmem:[#allocation2 + $0x88] sm:$0xff]
    %v63 = vld [vmem:[#allocation2 + $0x90] sm:$0xff]
    %v64 = vld [vmem:[#allocation2 + $0x98] sm:$0xff]
    %v65 = vld [vmem:[#allocation2 + $0xa0] sm:$0xff]
    %v66 = vld [vmem:[#allocation2 + $0xa8] sm:$0xff]
    %v67 = vld [vmem:[#allocation2 + $0xb0] sm:$0xff]
    %v68 = vld [vmem:[#allocation2 + $0xb8] sm:$0xff]
    %v69 = vld [vmem:[#allocation2 + $0xc0] sm:$0xff]
    %v70 = vld [vmem:[#allocation2 + $0xc8] sm:$0xff]
    %v71 = vld [vmem:[#allocation2 + $0xd0] sm:$0xff]
    %v72 = vld [vmem:[#allocation2 + $0xd8] sm:$0xff]
    %v73 = vld [vmem:[#allocation2 + $0xe0] sm:$0xff]
    %v74 = vld [vmem:[#allocation2 + $0xe8] sm:$0xff]
    %v75 = vld [vmem:[#allocation2 + $0xf0] sm:$0xff]
    %v76 = vld [vmem:[#allocation2 + $0xf8] sm:$0xff]
    %v77 = vld [vmem:[#allocation2 + $0x100] sm:$0xff]
    %v78 = vld [vmem:[#allocation2 + $0x108] sm:$0xff]
    %v79 = vld [vmem:[#allocation2 + $0x110] sm:$0xff]
    %v80 = vld [vmem:[#allocation2 + $0x118] sm:$0xff]
    %v81 = vld [vmem:[#allocation2 + $0x120] sm:$0xff]
    %v82 = vld [vmem:[#allocation2 + $0x128] sm:$0xff]
    %v83 = vld [vmem:[#allocation2 + $0x130] sm:$0xff]
    %v84 = vld [vmem:[#allocation2 + $0x138] sm:$0xff]
    %v85 = vld [vmem:[#allocation2 + $0x140] sm:$0xff]
    %v86 = vld [vmem:[#allocation2 + $0x148] sm:$0xff]
    %v87 = vld [vmem:[#allocation2 + $0x150] sm:$0xff]
    %v88 = vld [vmem:[#allocation2 + $0x158] sm:$0xff]
    %v89 = vld [vmem:[#allocation2 + $0x160] sm:$0xff]
    %v90 = vld [vmem:[#allocation2 + $0x168] sm:$0xff]
    %v91 = vld [vmem:[#allocation2 + $0x170] sm:$0xff]
    %v92 = vld [vmem:[#allocation2 + $0x178] sm:$0xff]
    %v93 = vld [vmem:[#allocation2 + $0x180] sm:$0xff]
    %v94 = vld [vmem:[%s2] sm:$0x1]
    %v96 = vlaneseq
    %v97 = vshrl.u32 %v96, 7
    %v98 = vsub.s32 0, %v97
    %v99 = vrot.slane %v94, %v98
    %vm101 = vcmask 64512
    %v103 = vsel %vm101, %v44, 0
    %105 = vmatprep.subr.mxu0 0.0
    %106 = vmatpush1.msra.mxu0 %v45
    %107 = vmatprep.subr.mxu0 0.0
    %108 = vmatpush1.msra.mxu0 %v46
    %109 = vmatprep.subr.mxu0 0.0
    %110 = vmatpush1.msra.mxu0 %v47
    %111 = vmatprep.subr.mxu0 0.0
    %112 = vmatpush1.msra.mxu0 %v48
    %113 = vmatprep.subr.mxu0 0.0
    %114 = vmatpush1.msra.mxu0 %v49
    %115 = vmatprep.subr.mxu0 0.0
    %116 = vmatpush1.msra.mxu0 %v50
    %117 = vmatprep.subr.mxu0 0.0
    %118 = vmatpush1.msra.mxu0 %v51
    %119 = vmatprep.subr.mxu0 0.0
    %120 = vmatpush1.msra.mxu0 %v52
    %121 = vmatprep.subr.mxu0 0.0
    %122 = vmatpush1.msra.mxu0 %v53
    %123 = vmatprep.subr.mxu0 0.0
    %124 = vmatpush1.msra.mxu0 %v54
    %125 = vmatprep.subr.mxu0 0.0
    %126 = vmatpush1.msra.mxu0 %v55
    %127 = vmatprep.subr.mxu0 0.0
    %128 = vmatpush1.msra.mxu0 %v56
    %129 = vmatprep.subr.mxu0 0.0
    %130 = vmatpush1.msra.mxu0 %v57
    %131 = vmatprep.subr.mxu0 0.0
    %132 = vmatpush1.msra.mxu0 %v58
    %133 = vmatprep.subr.mxu0 0.0
    %134 = vmatpush1.msra.mxu0 %v59
    %135 = vmatprep.subr.mxu0 0.0
    %136 = vmatpush1.msra.mxu0 %v60
    %137 = vmatprep.subr.mxu0 0.0
    %138 = vmatpush1.msra.mxu0 %v61
    %139 = vmatprep.subr.mxu0 0.0
    %140 = vmatpush1.msra.mxu0 %v62
    %141 = vmatprep.subr.mxu0 0.0
    %142 = vmatpush1.msra.mxu0 %v63
    %143 = vmatprep.subr.mxu0 0.0
    %144 = vmatpush1.msra.mxu0 %v64
    %145 = vmatprep.subr.mxu0 0.0
    %146 = vmatpush1.msra.mxu0 %v65
    %147 = vmatprep.subr.mxu0 0.0
    %148 = vmatpush1.msra.mxu0 %v66
    %149 = vmatprep.subr.mxu0 0.0
    %150 = vmatpush1.msra.mxu0 %v67
    %151 = vmatprep.subr.mxu0 0.0
    %152 = vmatpush1.msra.mxu0 %v68
    %153 = vmatprep.subr.mxu0 0.0
    %154 = vmatpush1.msra.mxu0 %v69
    %155 = vmatprep.subr.mxu0 0.0
    %156 = vmatpush1.msra.mxu0 %v70
    %157 = vmatprep.subr.mxu0 0.0
    %158 = vmatpush1.msra.mxu0 %v71
    %159 = vmatprep.subr.mxu0 0.0
    %160 = vmatpush1.msra.mxu0 %v72
    %161 = vmatprep.subr.mxu0 0.0
    %162 = vmatpush1.msra.mxu0 %v73
    %163 = vmatprep.subr.mxu0 0.0
    %164 = vmatpush1.msra.mxu0 %v74
    %165 = vmatprep.subr.mxu0 0.0
    %166 = vmatpush1.msra.mxu0 %v75
    %167 = vmatprep.subr.mxu0 0.0
    %168 = vmatpush1.msra.mxu0 %v76
    %169 = vmatprep.mubr.f32.mxu0 %v42
    %170 = vmatmul.mubr.f32.gmra.mrb[0].mxu0 %v41
    %v171 = vpop.f32.mrb[0].mxu0
    %v172 = vadd.f32 %v99, %v171
    %v173 = vpop.f32.mrb[0].mxu0
    %174 = vdwg.mxu0
    %175 = vmatprep.subr.mxu0 0.0
    %176 = vmatpush1.msra.mxu0 %v77
    %177 = vmatprep.subr.mxu0 0.0
    %178 = vmatpush1.msra.mxu0 %v78
    %179 = vmatprep.subr.mxu0 0.0
    %180 = vmatpush1.msra.mxu0 %v79
    %181 = vmatprep.subr.mxu0 0.0
    %182 = vmatpush1.msra.mxu0 %v80
    %183 = vmatprep.subr.mxu0 0.0
    %184 = vmatpush1.msra.mxu0 %v81
    %185 = vmatprep.subr.mxu0 0.0
    %186 = vmatpush1.msra.mxu0 %v82
    %187 = vmatprep.subr.mxu0 0.0
    %188 = vmatpush1.msra.mxu0 %v83
    %189 = vmatprep.subr.mxu0 0.0
    %190 = vmatpush1.msra.mxu0 %v84
    %191 = vmatprep.subr.mxu0 0.0
    %192 = vmatpush1.msra.mxu0 %v85
    %193 = vmatprep.subr.mxu0 0.0
    %194 = vmatpush1.msra.mxu0 %v86
    %195 = vmatprep.subr.mxu0 0.0
    %196 = vmatpush1.msra.mxu0 %v87
    %197 = vmatprep.subr.mxu0 0.0
    %198 = vmatpush1.msra.mxu0 %v88
    %199 = vmatprep.subr.mxu0 0.0
    %200 = vmatpush1.msra.mxu0 %v89
    %201 = vmatprep.subr.mxu0 0.0
    %202 = vmatpush1.msra.mxu0 %v90
    %203 = vmatprep.subr.mxu0 0.0
    %204 = vmatpush1.msra.mxu0 %v91
    %205 = vmatprep.subr.mxu0 0.0
    %206 = vmatpush1.msra.mxu0 %v92
    %207 = vmatprep.subr.mxu0 0.0
    %208 = vmatpush1.msra.mxu0 %v93
    %209 = vmatprep.subr.mxu0 0.0
    %210 = vmatpush1.msra.mxu0 0.0
    %211 = vmatprep.subr.mxu0 0.0
    %212 = vmatpush1.msra.mxu0 0.0
    %213 = vmatprep.subr.mxu0 0.0
    %214 = vmatpush1.msra.mxu0 0.0
    %215 = vmatprep.subr.mxu0 0.0
    %216 = vmatpush1.msra.mxu0 0.0
    %217 = vmatprep.subr.mxu0 0.0
    %218 = vmatpush1.msra.mxu0 0.0
    %219 = vmatprep.subr.mxu0 0.0
    %220 = vmatpush1.msra.mxu0 0.0
    %221 = vmatprep.subr.mxu0 0.0
    %222 = vmatpush1.msra.mxu0 0.0
    %223 = vmatprep.subr.mxu0 0.0
    %224 = vmatpush1.msra.mxu0 0.0
    %225 = vmatprep.subr.mxu0 0.0
    %226 = vmatpush1.msra.mxu0 0.0
    %227 = vmatprep.subr.mxu0 0.0
    %228 = vmatpush1.msra.mxu0 0.0
    %229 = vmatprep.subr.mxu0 0.0
    %230 = vmatpush1.msra.mxu0 0.0
    %231 = vmatprep.subr.mxu0 0.0
    %232 = vmatpush1.msra.mxu0 0.0
    %233 = vmatprep.subr.mxu0 0.0
    %234 = vmatpush1.msra.mxu0 0.0
    %235 = vmatprep.subr.mxu0 0.0
    %236 = vmatpush1.msra.mxu0 0.0
    %237 = vmatprep.subr.mxu0 0.0
    %238 = vmatpush1.msra.mxu0 0.0
    %239 = vmatprep.mubr.f32.mxu0 %v103
    %240 = vmatmul.mubr.f32.gmra.mrb[0].mxu0 %v43
    %v241 = vpop.f32.mrb[0].mxu0
    %v242 = vadd.f32 %v172, %v241
    %v243 = vpop.f32.mrb[0].mxu0
    %244 = vdwg.mxu0
    %v245 = vmax.f32 %v242, 0.0
    %v246 = vld [vmem:[%s3] sm:$0xff]
    %v247 = vld [vmem:[%s3 + $0x8] sm:$0xff]
    %v248 = vld [vmem:[%s3 + $0x10] sm:$0xff]
    %v249 = vld [vmem:[%s3 + $0x18] sm:$0xff]
    %v250 = vld [vmem:[%s3 + $0x20] sm:$0xff]
    %v251 = vld [vmem:[%s3 + $0x28] sm:$0xff]
    %v252 = vld [vmem:[%s3 + $0x30] sm:$0xff]
    %v253 = vld [vmem:[%s3 + $0x38] sm:$0xff]
    %v254 = vld [vmem:[%s3 + $0x40] sm:$0xff]
    %v255 = vld [vmem:[%s3 + $0x48] sm:$0xff]
    %v256 = vld [vmem:[%s3 + $0x50] sm:$0xff]
    %v257 = vld [vmem:[%s3 + $0x58] sm:$0xff]
    %v258 = vld [vmem:[%s3 + $0x60] sm:$0xff]
    %v259 = vld [vmem:[%s3 + $0x68] sm:$0xff]
    %v260 = vld [vmem:[%s3 + $0x70] sm:$0xff]
    %v261 = vld [vmem:[%s3 + $0x78] sm:$0xff]
    %v262 = vld [vmem:[%s4] sm:$0x1]
    %v264 = vlaneseq
    %v265 = vshrl.u32 %v264, 7
    %v266 = vsub.s32 0, %v265
    %v267 = vrot.slane %v262, %v266
    %269 = vmatprep.subr.mxu0 0.0
    %270 = vmatpush1.msra.mxu0 %v246
    %271 = vmatprep.subr.mxu0 0.0
    %272 = vmatpush1.msra.mxu0 %v247
    %273 = vmatprep.subr.mxu0 0.0
    %274 = vmatpush1.msra.mxu0 %v248
    %275 = vmatprep.subr.mxu0 0.0
    %276 = vmatpush1.msra.mxu0 %v249
    %277 = vmatprep.subr.mxu0 0.0
    %278 = vmatpush1.msra.mxu0 %v250
    %279 = vmatprep.subr.mxu0 0.0
    %280 = vmatpush1.msra.mxu0 %v251
    %281 = vmatprep.subr.mxu0 0.0
    %282 = vmatpush1.msra.mxu0 %v252
    %283 = vmatprep.subr.mxu0 0.0
    %284 = vmatpush1.msra.mxu0 %v253
    %285 = vmatprep.subr.mxu0 0.0
    %286 = vmatpush1.msra.mxu0 %v254
    %287 = vmatprep.subr.mxu0 0.0
    %288 = vmatpush1.msra.mxu0 %v255
    %289 = vmatprep.subr.mxu0 0.0
    %290 = vmatpush1.msra.mxu0 %v256
    %291 = vmatprep.subr.mxu0 0.0
    %292 = vmatpush1.msra.mxu0 %v257
    %293 = vmatprep.subr.mxu0 0.0
    %294 = vmatpush1.msra.mxu0 %v258
    %295 = vmatprep.subr.mxu0 0.0
    %296 = vmatpush1.msra.mxu0 %v259
    %297 = vmatprep.subr.mxu0 0.0
    %298 = vmatpush1.msra.mxu0 %v260
    %299 = vmatprep.subr.mxu0 0.0
    %300 = vmatpush1.msra.mxu0 %v261
    %301 = vmatprep.subr.mxu0 0.0
    %302 = vmatpush1.msra.mxu0 0.0
    %303 = vmatprep.subr.mxu0 0.0
    %304 = vmatpush1.msra.mxu0 0.0
    %305 = vmatprep.subr.mxu0 0.0
    %306 = vmatpush1.msra.mxu0 0.0
    %307 = vmatprep.subr.mxu0 0.0
    %308 = vmatpush1.msra.mxu0 0.0
    %309 = vmatprep.subr.mxu0 0.0
    %310 = vmatpush1.msra.mxu0 0.0
    %311 = vmatprep.subr.mxu0 0.0
    %312 = vmatpush1.msra.mxu0 0.0
    %313 = vmatprep.subr.mxu0 0.0
    %314 = vmatpush1.msra.mxu0 0.0
    %315 = vmatprep.subr.mxu0 0.0
    %316 = vmatpush1.msra.mxu0 0.0
    %317 = vmatprep.subr.mxu0 0.0
    %318 = vmatpush1.msra.mxu0 0.0
    %319 = vmatprep.subr.mxu0 0.0
    %320 = vmatpush1.msra.mxu0 0.0
    %321 = vmatprep.subr.mxu0 0.0
    %322 = vmatpush1.msra.mxu0 0.0
    %323 = vmatprep.subr.mxu0 0.0
    %324 = vmatpush1.msra.mxu0 0.0
    %325 = vmatprep.subr.mxu0 0.0
    %326 = vmatpush1.msra.mxu0 0.0
    %327 = vmatprep.subr.mxu0 0.0
    %328 = vmatpush1.msra.mxu0 0.0
    %329 = vmatprep.subr.mxu0 0.0
    %330 = vmatpush1.msra.mxu0 0.0
    %331 = vmatprep.subr.mxu0 0.0
    %332 = vmatpush1.msra.mxu0 0.0
    %333 = vmatprep.mubr.f32.mxu0 0.0
    %334 = vmatmul.mubr.f32.gmra.mrb[0].mxu0 %v245
    %v335 = vpop.f32.mrb[0].mxu0
    %v336 = vadd.f32 %v267, %v335
    %v337 = vpop.f32.mrb[0].mxu0
    %338 = vdwg.mxu0
    %v339 = vmax.f32 %v336, 0.0
    %v340 = vld [vmem:[%s5] sm:$0xff]
    %v341 = vld [vmem:[%s5 + $0x8] sm:$0xff]
    %v342 = vld [vmem:[%s5 + $0x10] sm:$0xff]
    %v343 = vld [vmem:[%s5 + $0x18] sm:$0xff]
    %v344 = vld [vmem:[%s6] sm:$0x1]
    %v346 = vlaneseq
    %v347 = vshrl.u32 %v346, 7
    %v348 = vsub.s32 0, %v347
    %v349 = vrot.slane %v344, %v348
    %vm351 = vcmask 261120
    %v353 = vsel %vm351, %v339, 0
    %355 = vmatprep.subr.mxu0 0.0
    %356 = vmatpush1.msra.mxu0 %v340
    %357 = vmatprep.subr.mxu0 0.0
    %358 = vmatpush1.msra.mxu0 %v341
    %359 = vmatprep.subr.mxu0 0.0
    %360 = vmatpush1.msra.mxu0 %v342
    %361 = vmatprep.subr.mxu0 0.0
    %362 = vmatpush1.msra.mxu0 %v343
    %363 = vmatprep.subr.mxu0 0.0
    %364 = vmatpush1.msra.mxu0 0.0
    %365 = vmatprep.subr.mxu0 0.0
    %366 = vmatpush1.msra.mxu0 0.0
    %367 = vmatprep.subr.mxu0 0.0
    %368 = vmatpush1.msra.mxu0 0.0
    %369 = vmatprep.subr.mxu0 0.0
    %370 = vmatpush1.msra.mxu0 0.0
    %371 = vmatprep.subr.mxu0 0.0
    %372 = vmatpush1.msra.mxu0 0.0
    %373 = vmatprep.subr.mxu0 0.0
    %374 = vmatpush1.msra.mxu0 0.0
    %375 = vmatprep.subr.mxu0 0.0
    %376 = vmatpush1.msra.mxu0 0.0
    %377 = vmatprep.subr.mxu0 0.0
    %378 = vmatpush1.msra.mxu0 0.0
    %379 = vmatprep.subr.mxu0 0.0
    %380 = vmatpush1.msra.mxu0 0.0
    %381 = vmatprep.subr.mxu0 0.0
    %382 = vmatpush1.msra.mxu0 0.0
    %383 = vmatprep.subr.mxu0 0.0
    %384 = vmatpush1.msra.mxu0 0.0
    %385 = vmatprep.subr.mxu0 0.0
    %386 = vmatpush1.msra.mxu0 0.0
    %387 = vmatprep.subr.mxu0 0.0
    %388 = vmatpush1.msra.mxu0 0.0
    %389 = vmatprep.subr.mxu0 0.0
    %390 = vmatpush1.msra.mxu0 0.0
    %391 = vmatprep.subr.mxu0 0.0
    %392 = vmatpush1.msra.mxu0 0.0
    %393 = vmatprep.subr.mxu0 0.0
    %394 = vmatpush1.msra.mxu0 0.0
    %395 = vmatprep.subr.mxu0 0.0
    %396 = vmatpush1.msra.mxu0 0.0
    %397 = vmatprep.subr.mxu0 0.0
    %398 = vmatpush1.msra.mxu0 0.0
    %399 = vmatprep.subr.mxu0 0.0
    %400 = vmatpush1.msra.mxu0 0.0
    %401 = vmatprep.subr.mxu0 0.0
    %402 = vmatpush1.msra.mxu0 0.0
    %403 = vmatprep.subr.mxu0 0.0
    %404 = vmatpush1.msra.mxu0 0.0
    %405 = vmatprep.subr.mxu0 0.0
    %406 = vmatpush1.msra.mxu0 0.0
    %407 = vmatprep.subr.mxu0 0.0
    %408 = vmatpush1.msra.mxu0 0.0
    %409 = vmatprep.subr.mxu0 0.0
    %410 = vmatpush1.msra.mxu0 0.0
    %411 = vmatprep.subr.mxu0 0.0
    %412 = vmatpush1.msra.mxu0 0.0
    %413 = vmatprep.subr.mxu0 0.0
    %414 = vmatpush1.msra.mxu0 0.0
    %415 = vmatprep.subr.mxu0 0.0
    %416 = vmatpush1.msra.mxu0 0.0
    %417 = vmatprep.subr.mxu0 0.0
    %418 = vmatpush1.msra.mxu0 0.0
    %419 = vmatprep.mubr.f32.mxu0 0.0
    %420 = vmatmul.mubr.f32.gmra.mrb[0].mxu0 %v353
    %v421 = vpop.f32.mrb[0].mxu0
    %v422 = vadd.f32 %v349, %v421
    %v423 = vpop.f32.mrb[0].mxu0
    %424 = vdwg.mxu0
    %425 = vst [vmem:[#allocation5] sm:$0xff] %v422
    // Predicated region
    $region34: #{tpu_custom_call.1} parent=1 // pred_check
      _
    $region35: #{tpu_custom_call.1} parent=1 // pred_check_branch
      %427 = sbr.rel (0) target = $region37
    $region36: #{tpu_custom_call.1} parent=1 // pred_region
      %s429 = ssub.s32 128, 128
      %430 = vsyncadd [#allocation4], %s429
      %s432 = sshll.u32 [#allocation5], 4
      %s433 = int_to_ptr.vmem [resolvable:$true] %s432
      %435 = dma.vmem_to_hbm [thread:$0]  %s433, 128, %s7, [#allocation4]
    $region37: #{tpu_custom_call.1} parent=1 // pred_fallthru
      _
    // Predicated region
    $region38: #{tpu_custom_call.1} parent=1 // pred_check
      _
    $region39: #{tpu_custom_call.1} parent=1 // pred_check_branch
      %437 = sbr.rel (0) target = $region41
    $region40: #{tpu_custom_call.1} parent=1 // pred_region
      %438 = dma.done [#allocation4], 128
    $region41: #{tpu_custom_call.1} parent=1 // pred_fallthru
      _
    %439 = vsyncpa [#allocation3], 1
    %440 = vsyncpa [#allocation4], 1

</llo_original>
